<compile_context>
chip_gen: v5e
topology: v5e:2x2
jax: 0.10.0
libtpu: 0.0.40
codegen_flags: <defaults>
</compile_context>

<pallas_src>
import functools

import jax
import jax.numpy as jnp
from jax.experimental import pallas as pl
from jax.experimental.pallas import tpu as pltpu


def _round_up(x, m):
    return -(-x // m) * m


def _cdiv(a, b):
    return -(-a // b)


# ---------------------------------------------------------------------------
# Kernels
# ---------------------------------------------------------------------------
def _mean_kernel_single(x_ref, o_ref, *, inv_hw):
    """Whole H*W extent in one block.  x_ref: (block_nc, hw); o_ref: (1, block_nc)."""
    x = x_ref[...].astype(jnp.float32)            # f32 accumulation for low-precision inputs
    sums = jnp.sum(x, axis=1)                     # (block_nc,) lane-group adds + XLU reduce
    # One VPU multiply by the precomputed reciprocal; lane-dense store.
    o_ref[...] = (sums * inv_hw).astype(o_ref.dtype).reshape(1, -1)


def _mean_kernel_tiled(x_ref, o_ref, acc_ref, *, hw, block_hw, inv_hw, mask_hw):
    """H*W tiled over grid axis 1 (reduction axis, kept last / 'arbitrary').

    x_ref: (block_nc, block_hw); o_ref: (1, block_nc); acc_ref: (block_nc, 1) f32.
    """
    k = pl.program_id(1)

    @pl.when(k == 0)
    def _():
        acc_ref[...] = jnp.zeros_like(acc_ref)

    x = x_ref[...].astype(jnp.float32)
    if mask_hw:
        # Ragged last HW block: VMEM past column `hw` holds stale garbage
        # (the DMA only copies the valid region), so zero it before reducing.
        col = k * block_hw + jax.lax.broadcasted_iota(jnp.int32, x.shape, 1)
        x = jnp.where(col < hw, x, 0.0)

    # Lane-group VPU adds + one cross-lane XLU reduce per 8-row vreg; both run
    # in slots that sit idle under the HBM-bandwidth bound.
    acc_ref[...] += jnp.sum(x, axis=1, keepdims=True)

    @pl.when(k == pl.num_programs(1) - 1)
    def _():
        totals = jnp.sum(acc_ref[...], axis=1)    # (block_nc,)
        o_ref[...] = (totals * inv_hw).astype(o_ref.dtype).reshape(1, -1)


# ---------------------------------------------------------------------------
# Tiling / VMEM planning
# ---------------------------------------------------------------------------
def _vmem_plan():
    """Return (vmem_limit_bytes, per-input-tile budget) sized to this chip."""
    try:
        phys = int(pltpu.get_tpu_info().vmem_capacity_bytes)
    except Exception:
        phys = 64 << 20                           # conservative (v7x-sized) fallback
    # Physical VMEM: 128 MiB (v5e/v6e), 64 MiB per core (v7x).  The scoped
    # default is only 16-32 MiB, so always set vmem_limit_bytes explicitly.
    vmem_limit = min((phys * 3) // 4, 96 << 20)   # v7x: 48 MiB; v5e/v6e: 96 MiB
    tile_budget = (vmem_limit - (4 << 20)) // 2   # double-buffered input tile
    return vmem_limit, tile_budget


def _pick_tiles(nc, hw, itemsize, tile_budget):
    """Choose (block_nc, block_hw).

    block_nc is either the full NC extent or a multiple of 128; block_hw is
    either the full HW extent or a multiple of 128 lanes.  Both choices keep
    the input and the lane-dense output BlockSpecs on legal native tiles for
    every dtype, with no host-side padding.
    """
    row_bytes = hw * itemsize
    min_rows = nc if nc <= 128 else 128
    if min_rows * row_bytes <= tile_budget:
        # Full rows fit: single reduction step per NC block.
        rows_fit = tile_budget // row_bytes
        if rows_fit >= nc:
            block_nc = nc
        else:
            block_nc = min((rows_fit // 128) * 128, _round_up(nc, 128))
            # Spread NC evenly over the resulting number of blocks so the
            # ragged last block is not much smaller than the others.
            n_blocks = _cdiv(nc, block_nc)
            block_nc = _round_up(_cdiv(nc, n_blocks), 128)
        return block_nc, hw
    # Rows too long for the budget: tile HW as well (multi-step reduction).
    if nc <= 128:
        block_nc = nc
        block_hw = (tile_budget // (block_nc * itemsize) // 128) * 128
    else:
        block_nc = 128
        block_hw = min(_round_up(hw, 128), 8192)
        rows_fit = tile_budget // (block_hw * itemsize)
        block_nc = min(_round_up(nc, 128), max(128, (rows_fit // 128) * 128))
    block_hw = max(128, min(block_hw, _round_up(hw, 128)))
    return block_nc, block_hw


# ---------------------------------------------------------------------------
# Wrapper
# ---------------------------------------------------------------------------
def global_mean_pool(x):
    """Pallas equivalent of GlobalMeanPool.forward: NCHW -> (1, N*C) means."""
    n, c, h, w = x.shape
    nc, hw = n * c, h * w
    itemsize = jnp.dtype(x.dtype).itemsize

    # Free metadata reshape (merges adjacent contiguous dims): no HBM copy.
    x2d = x.reshape(nc, hw)

    vmem_limit, tile_budget = _vmem_plan()
    block_nc, block_hw = _pick_tiles(nc, hw, itemsize, tile_budget)
    nc_blocks = _cdiv(nc, block_nc)
    hw_blocks = _cdiv(hw, block_hw)
    inv_hw = 1.0 / float(hw)                      # divide by the *true* spatial size

    cost = pl.CostEstimate(
        flops=nc * hw,
        transcendentals=0,
        bytes_accessed=nc * hw * itemsize + nc * itemsize,
    )

    if hw_blocks == 1:
        kernel = functools.partial(_mean_kernel_single, inv_hw=inv_hw)
        grid_spec = pltpu.PrefetchScalarGridSpec(
            num_scalar_prefetch=0,
            grid=(nc_blocks,),
            in_specs=[pl.BlockSpec((block_nc, hw), lambda i: (i, 0))],
            out_specs=pl.BlockSpec((1, block_nc), lambda i: (0, i)),
        )
        dim_sem = ("parallel",)
    else:
        kernel = functools.partial(
            _mean_kernel_tiled,
            hw=hw, block_hw=block_hw, inv_hw=inv_hw,
            mask_hw=(hw % block_hw) != 0,
        )
        grid_spec = pltpu.PrefetchScalarGridSpec(
            num_scalar_prefetch=0,
            grid=(nc_blocks, hw_blocks),
            in_specs=[pl.BlockSpec((block_nc, block_hw), lambda i, k: (i, k))],
            out_specs=pl.BlockSpec((1, block_nc), lambda i, k: (0, i)),
            scratch_shapes=[pltpu.VMEM((block_nc, 1), jnp.float32)],
        )
        dim_sem = ("parallel", "arbitrary")

    out = pl.pallas_call(
        kernel,
        out_shape=jax.ShapeDtypeStruct((1, nc), x.dtype),
        grid_spec=grid_spec,
        compiler_params=pltpu.CompilerParams(
            # NC rows are independent -> "parallel" (shards across v7x's 2 TCs);
            # HW is the reduction axis -> "arbitrary", kept last.
            dimension_semantics=dim_sem,
            vmem_limit_bytes=vmem_limit,
        ),
        cost_estimate=cost,
    )(x2d)

    # adaptive_avg_pool2d(C, 1) -> (N, C, 1, 1); .reshape(1, -1) -> (1, N*C).
    return out


if __name__ == "__main__":
    key = jax.random.PRNGKey(0)
    # Small NCHW feature map: batch=2, channels=4, 16x16 spatial.
    x = jax.random.normal(key, (2, 4, 16, 16), dtype=jnp.float32)

    y = jax.jit(global_mean_pool)(x)
    y = jax.block_until_ready(y)

    # Reference: mean over H, W then flatten to (1, N*C).
    ref = jnp.mean(x, axis=(2, 3)).reshape(1, -1)
    assert y.shape == (1, 8), y.shape
    assert jnp.allclose(y, ref, atol=1e-6, rtol=1e-6), (y, ref)

    print("KERNEL_OK")
</pallas_src>

<mosaic_0001>
module attributes {stable_mosaic.version = 11 : i64} {
  func.func @_mean_kernel_single(%arg0: i32, %arg1: memref<8x256xf32, #tpu.memory_space<vmem>>, %arg2: memref<1x8xf32, #tpu.memory_space<vmem>>) attributes {dimension_semantics = [#tpu.dimension_semantics<parallel>], iteration_bounds = array<i64: 1>, scalar_prefetch = 0 : i64, scratch_operands = 0 : i64, tpu.core_type = #tpu.core_type<tc>, window_params = [{transform_indices = @transform_0, window_bounds = array<i64: 8, 256>}, {transform_indices = @transform_1, window_bounds = array<i64: 1, 8>}]} {
    %c0 = arith.constant 0 : index
    %c0_0 = arith.constant 0 : index
    %0 = vector.load %arg1[%c0, %c0_0] : memref<8x256xf32, #tpu.memory_space<vmem>>, vector<8x256xf32>
    %cst = arith.constant dense<0.000000e+00> : vector<8xf32>
    %1 = vector.multi_reduction <add>, %0, %cst [1] : vector<8x256xf32> to vector<8xf32>
    %cst_1 = arith.constant 3.906250e-03 : f32
    %2 = vector.broadcast %cst_1 : f32 to vector<8xf32>
    %3 = arith.mulf %1, %2 : vector<8xf32>
    %4 = vector.shape_cast %3 : vector<8xf32> to vector<1x8xf32>
    %c0_2 = arith.constant 0 : index
    %c0_3 = arith.constant 0 : index
    %5 = vector.load %arg2[%c0_2, %c0_3] : memref<1x8xf32, #tpu.memory_space<vmem>>, vector<1x8xf32>
    tpu.vector_store %arg2[%c0_2, %c0_3], %4 {strides = array<i32>} : memref<1x8xf32, #tpu.memory_space<vmem>>, vector<1x8xf32>,
    return
  }
  func.func @transform_0(%arg0: i32) -> (i32, i32) {
    %c0_i32 = arith.constant 0 : i32
    %c0_i32_0 = arith.constant 0 : i32
    return %arg0, %c0_i32 : i32, i32
  }
  func.func @transform_1(%arg0: i32) -> (i32, i32) {
    %c0_i32 = arith.constant 0 : i32
    %c0_i32_0 = arith.constant 0 : i32
    return %c0_i32, %arg0 : i32, i32
  }
}

</mosaic_0001>

<llo_original>
// kernel: global_mean_pool.1
$region0: #{global_mean_pool.1}
  #allocation0 [shape = 'u32[]', space=smem, size = 0x4, offset = 0x4, fixed_abs, tag = 'smem constant byte address 0x4 - core index']
  #allocation1 [shape = 'u32[72,128]{1,0:T(1,128)}', space=vmem, size = 0x9000, scoped, tag = 'internal scratch']
  %s0 = inlined_call_operand.vmem [shape: f32[8,256], index: 0, kind: input, shape index: {}]
  %s1 = inlined_call_operand.hbm [shape: f32[1,8], index: 1, kind: output, shape index: {}]
  %s2 = sld [smem:[#allocation0]]
  $region14: #{global_mean_pool.1} parent=0
    _
  %s4 = ssub.s32 1, %s2
  %s5 = scalar_select 0, %s4, %s2
  $region1: #{global_mean_pool.1} parent=0
    #allocation2 [shape = 'u8[512]{0}', space=vmem, size = 0x400, scoped, tag = 'output window, operand 0, single buffered']
    #allocation3 [shape = 's32[1]{0}', space=sflag, size = 0x4, scoped, tag = 'scoped memory for global_mean_pool.1']
    %6 = vsyncpa [#allocation3], 0
    // Predicated region
    $region2: #{global_mean_pool.1} parent=1 // pred_check
      _
    $region3: #{global_mean_pool.1} parent=1 // pred_check_branch
      %8 = sbr.rel (0) target = $region5
    $region4: #{global_mean_pool.1} parent=1 // pred_region
      _
    $region5: #{global_mean_pool.1} parent=1 // pred_fallthru
      _
    %v9 = vld [vmem:[%s0] sm:$0xff]
    %v10 = vld [vmem:[%s0 + $0x8] sm:$0xff]
    %v11 = vadd.f32 %v9, %v10
    %12 = vadd.xlane.f32.xlu0 %v11
    %v13 = vpop.xlane.xlu0 %12
    %v14 = vmul.f32 %v13, 0.00390625
    %v16 = vlaneseq
    %v17 = vand.u32 %v16, 127
    %v18 = vperm.slane %v14, %v17
    %vm20 = vcmask 57344
    %21 = vst.msk [vmem:[#allocation2] sm:$0x1] %vm20, %v18
    // Predicated region
    $region6: #{global_mean_pool.1} parent=1 // pred_check
      _
    $region7: #{global_mean_pool.1} parent=1 // pred_check_branch
      %23 = sbr.rel (0) target = $region9
    $region8: #{global_mean_pool.1} parent=1 // pred_region
      %25 = vsyncadd [#allocation3], 0
      %s27 = sshll.u32 [#allocation2], 4
      %s28 = int_to_ptr.vmem [resolvable:$true] %s27
      %s29 = sshll.u32 %s1, 4
      %s30 = int_to_ptr.hbm [resolvable:$true] %s29
      %32 = dma.vmem_to_hbm [thread:$0]  %s28, 16, %s30, [#allocation3]
    $region9: #{global_mean_pool.1} parent=1 // pred_fallthru
      _
    // Predicated region
    $region10: #{global_mean_pool.1} parent=1 // pred_check
      _
    $region11: #{global_mean_pool.1} parent=1 // pred_check_branch
      %34 = sbr.rel (0) target = $region13
    $region12: #{global_mean_pool.1} parent=1 // pred_region
      %36 = dma.done [#allocation3], 16
    $region13: #{global_mean_pool.1} parent=1 // pred_fallthru
      _
    %37 = vsyncpa [#allocation3], 1

</llo_original>
